<compile_context>
chip_gen: v7x
topology: tpu7x:2x2x1
jax: 0.10.0
libtpu: 0.0.40
codegen_flags: <defaults>
</compile_context>

<pallas_src>
from functools import partial

import jax
import jax.numpy as jnp
from jax.experimental import pallas as pl
from jax.experimental.pallas import tpu as pltpu


# ----------------------------------------------------------------------------
# Fused dn kernel: conv3x3 -> ReLU -> conv3x3, one image per grid step.
# ----------------------------------------------------------------------------
def _dn_kernel(H, W, x_ref, w1_ref, b1_ref, w2_ref, b2_ref, m0_ref, m2_ref,
               o_ref):
    """Shapes (all f32, P = H*W):
      x_ref : (1, Cin,  P)     flat channels-first image
      w1_ref: (Chid, 9*Cin)    K ordered as (ky*3 + kx)*Cin + ci
      b1_ref: (Chid, 1)
      w2_ref: (Cout, 9*Chid)
      b2_ref: (Cout, 1)
      m0_ref: (1, P)           1.0 where w > 0      (validity of kx == 0 taps)
      m2_ref: (1, P)           1.0 where w < W - 1  (validity of kx == 2 taps)
      o_ref : (1, Cout, P)
    """
    P = H * W
    halo = W + 1

    x = x_ref[0]                          # (Cin, P)
    chid = w1_ref.shape[0]
    m0 = m0_ref[...]
    m2 = m2_ref[...]

    def row_padded(a):
        # [1 zero | W zeros (row -1) | image | W zeros (row H) | 1 zero]
        z = jnp.zeros((a.shape[0], halo), jnp.float32)
        return jnp.concatenate([z, a, z], axis=1)      # (c, P + 2*halo)

    def tap(a_pad, ky, kx):
        # Tap (ky, kx) of a 3x3 'same' conv is a contiguous lane-slice of the
        # row-padded flat image; kx = 0 / 2 additionally need the left / right
        # image column zeroed (the flat layout wraps those reads into the
        # neighbouring row).
        t = a_pad[:, ky * W + kx: ky * W + kx + P]     # (c, P)
        if kx == 0:
            t = t * m0
        elif kx == 2:
            t = t * m2
        return t

    # ---- layer 1: single im2col matmul (Chid, 9*Cin) @ (9*Cin, P) ----------
    xp = row_padded(x)
    im1 = jnp.concatenate(
        [tap(xp, ky, kx) for ky in range(3) for kx in range(3)], axis=0)
    h = jnp.dot(w1_ref[...], im1,
                preferred_element_type=jnp.float32) + b1_ref[...]
    h = jnp.maximum(h, 0.0)                            # (Chid, P)

    # ---- layer 2: per-ky im2col, 3 matmuls (Cout, 3*Chid) @ (3*Chid, P) ----
    hp = row_padded(h)
    w2 = w2_ref[...]
    acc = jnp.zeros((w2.shape[0], P), jnp.float32)
    for ky in range(3):
        chunk = jnp.concatenate([tap(hp, ky, kx) for kx in range(3)], axis=0)
        acc = acc + jnp.dot(w2[:, ky * 3 * chid:(ky + 1) * 3 * chid], chunk,
                            preferred_element_type=jnp.float32)
    o_ref[0] = (acc + b2_ref[...]).astype(o_ref.dtype)


def dn_apply(x_nchw, params):
    """dn(x): 2-layer 3x3 CNN, NCHW in / NCHW out, one fused Pallas call."""
    N, C, H, W = x_nchw.shape
    P = H * W
    w1, b1, w2, b2 = params["w1"], params["b1"], params["w2"], params["b2"]
    chid = w1.shape[-1]
    cout = w2.shape[-1]

    # Layout plumbing only (free reshapes, no pad / transpose round trips).
    x_flat = x_nchw.reshape(N, C, P).astype(jnp.float32)
    w1f = w1.reshape(9 * C, chid).T                    # (Chid, 9*Cin)
    w2f = w2.reshape(9 * chid, cout).T                 # (Cout, 9*Chid)
    b1c = b1.reshape(chid, 1)
    b2c = b2.reshape(cout, 1)
    col = jnp.arange(P, dtype=jnp.int32) % W
    m0 = (col != 0).astype(jnp.float32).reshape(1, P)
    m2 = (col != W - 1).astype(jnp.float32).reshape(1, P)

    out_flat = pl.pallas_call(
        partial(_dn_kernel, H, W),
        out_shape=jax.ShapeDtypeStruct((N, cout, P), jnp.float32),
        grid=(N,),
        in_specs=[
            pl.BlockSpec((1, C, P), lambda n: (n, 0, 0)),
            pl.BlockSpec((chid, 9 * C), lambda n: (0, 0)),
            pl.BlockSpec((chid, 1), lambda n: (0, 0)),
            pl.BlockSpec((cout, 9 * chid), lambda n: (0, 0)),
            pl.BlockSpec((cout, 1), lambda n: (0, 0)),
            pl.BlockSpec((1, P), lambda n: (0, 0)),
            pl.BlockSpec((1, P), lambda n: (0, 0)),
        ],
        out_specs=pl.BlockSpec((1, cout, P), lambda n: (n, 0, 0)),
        compiler_params=pltpu.CompilerParams(
            dimension_semantics=("parallel",)),
    )(x_flat, w1f, b1c, w2f, b2c, m0, m2)
    return out_flat.reshape(N, cout, H, W)


# ----------------------------------------------------------------------------
# Parameter init (weights_init: Conv2d weight ~ N(0, 0.02), bias = 0)
# ----------------------------------------------------------------------------
def init_params(key, channels, hidden):
    k1, k2 = jax.random.split(key)
    return {
        "dn": {
            "w1": jax.random.normal(k1, (3, 3, channels, hidden),
                                    jnp.float32) * 0.02,
            "b1": jnp.zeros((hidden,), jnp.float32),
            "w2": jax.random.normal(k2, (3, 3, hidden, channels),
                                    jnp.float32) * 0.02,
            "b2": jnp.zeros((channels,), jnp.float32),
        }
    }


# ----------------------------------------------------------------------------
# TestSingleStageDenoiseOnly.forward
# ----------------------------------------------------------------------------
@jax.jit
def test_single_stage_denoise_only_forward(x, params):
    x_dn = dn_apply(x, params["dn"])
    return {"inp": [x], "res": [x_dn], "dnx": [x_dn], "nx": [x]}


# Pure-JAX reference of the dn sub-net (for correctness checking only).
def dn_reference(x_nchw, p):
    h = jax.lax.conv_general_dilated(
        x_nchw, p["w1"], window_strides=(1, 1), padding="SAME",
        dimension_numbers=("NCHW", "HWIO", "NCHW"))
    h = jnp.maximum(h + p["b1"].reshape(1, -1, 1, 1), 0.0)
    o = jax.lax.conv_general_dilated(
        h, p["w2"], window_strides=(1, 1), padding="SAME",
        dimension_numbers=("NCHW", "HWIO", "NCHW"))
    return o + p["b2"].reshape(1, -1, 1, 1)


# ----------------------------------------------------------------------------
if __name__ == "__main__":
    key = jax.random.PRNGKey(0)
    k_x, k_p = jax.random.split(key)

    N, C, H, W = 2, 4, 16, 16
    hidden = 32

    x = jax.random.uniform(k_x, (N, C, H, W), jnp.float32)
    params = init_params(k_p, C, hidden)

    out = test_single_stage_denoise_only_forward(x, params)
    out = jax.block_until_ready(out)

    # shape / semantics checks
    for k in ("inp", "res", "dnx", "nx"):
        assert len(out[k]) == 1 and out[k][0].shape == (N, C, H, W)
    assert bool(jnp.all(out["inp"][0] == x))
    assert bool(jnp.all(out["nx"][0] == x))
    assert bool(jnp.all(out["res"][0] == out["dnx"][0]))
    assert bool(jnp.all(jnp.isfinite(out["res"][0])))

    # numeric check of the fused Pallas conv stack vs lax.conv reference
    ref = dn_reference(x, params["dn"])
    err = float(jnp.max(jnp.abs(out["res"][0] - ref)))
    assert err < 1e-3, f"mismatch vs reference: {err}"

    print("KERNEL_OK")
</pallas_src>

<mosaic_0001>
module attributes {stable_mosaic.version = 11 : i64} {
  func.func @_dn_kernel(%arg0: i32, %arg1: memref<1x4x256xf32, #tpu.memory_space<vmem>>, %arg2: memref<32x36xf32, #tpu.memory_space<vmem>>, %arg3: memref<32x1xf32, #tpu.memory_space<vmem>>, %arg4: memref<4x288xf32, #tpu.memory_space<vmem>>, %arg5: memref<4x1xf32, #tpu.memory_space<vmem>>, %arg6: memref<1x256xf32, #tpu.memory_space<vmem>>, %arg7: memref<1x256xf32, #tpu.memory_space<vmem>>, %arg8: memref<1x4x256xf32, #tpu.memory_space<vmem>>) attributes {dimension_semantics = [#tpu.dimension_semantics<parallel>], iteration_bounds = array<i64: 2>, scalar_prefetch = 0 : i64, scratch_operands = 0 : i64, tpu.core_type = #tpu.core_type<tc>, window_params = [{transform_indices = @transform_0, window_bounds = array<i64: 1, 4, 256>}, {pipeline_mode = #tpu.pipeline_mode<synchronous>, transform_indices = @transform_1, window_bounds = array<i64: 32, 36>}, {pipeline_mode = #tpu.pipeline_mode<synchronous>, transform_indices = @transform_2, window_bounds = array<i64: 32, 1>}, {pipeline_mode = #tpu.pipeline_mode<synchronous>, transform_indices = @transform_3, window_bounds = array<i64: 4, 288>}, {pipeline_mode = #tpu.pipeline_mode<synchronous>, transform_indices = @transform_4, window_bounds = array<i64: 4, 1>}, {pipeline_mode = #tpu.pipeline_mode<synchronous>, transform_indices = @transform_5, window_bounds = array<i64: 1, 256>}, {pipeline_mode = #tpu.pipeline_mode<synchronous>, transform_indices = @transform_6, window_bounds = array<i64: 1, 256>}, {transform_indices = @transform_7, window_bounds = array<i64: 1, 4, 256>}]} {
    %c0 = arith.constant 0 : index
    %c0_0 = arith.constant 0 : index
    %c0_1 = arith.constant 0 : index
    %0 = vector.load %arg1[%c0, %c0_0, %c0_1] : memref<1x4x256xf32, #tpu.memory_space<vmem>>, vector<1x4x256xf32>
    %1 = vector.shape_cast %0 : vector<1x4x256xf32> to vector<4x256xf32>
    %c0_2 = arith.constant 0 : index
    %c0_3 = arith.constant 0 : index
    %2 = vector.load %arg6[%c0_2, %c0_3] : memref<1x256xf32, #tpu.memory_space<vmem>>, vector<1x256xf32>
    %c0_4 = arith.constant 0 : index
    %c0_5 = arith.constant 0 : index
    %3 = vector.load %arg7[%c0_4, %c0_5] : memref<1x256xf32, #tpu.memory_space<vmem>>, vector<1x256xf32>
    %cst = arith.constant 0.000000e+00 : f32
    %4 = vector.broadcast %cst : f32 to vector<4x17xf32>
    %5 = tpu.concatenate %4, %1, %4 in 1 : vector<4x17xf32>, vector<4x256xf32>, vector<4x17xf32> -> vector<4x290xf32>
    %6 = vector.extract_strided_slice %5 {offsets = [0, 0], sizes = [4, 256], strides = [1, 1]} : vector<4x290xf32> to vector<4x256xf32>
    %7 = vector.broadcast %2 : vector<1x256xf32> to vector<4x256xf32>
    %8 = arith.mulf %6, %7 : vector<4x256xf32>
    %9 = vector.extract_strided_slice %5 {offsets = [0, 1], sizes = [4, 256], strides = [1, 1]} : vector<4x290xf32> to vector<4x256xf32>
    %10 = vector.extract_strided_slice %5 {offsets = [0, 2], sizes = [4, 256], strides = [1, 1]} : vector<4x290xf32> to vector<4x256xf32>
    %11 = vector.broadcast %3 : vector<1x256xf32> to vector<4x256xf32>
    %12 = arith.mulf %10, %11 : vector<4x256xf32>
    %13 = vector.extract_strided_slice %5 {offsets = [0, 16], sizes = [4, 256], strides = [1, 1]} : vector<4x290xf32> to vector<4x256xf32>
    %14 = vector.broadcast %2 : vector<1x256xf32> to vector<4x256xf32>
    %15 = arith.mulf %13, %14 : vector<4x256xf32>
    %16 = vector.extract_strided_slice %5 {offsets = [0, 17], sizes = [4, 256], strides = [1, 1]} : vector<4x290xf32> to vector<4x256xf32>
    %17 = vector.extract_strided_slice %5 {offsets = [0, 18], sizes = [4, 256], strides = [1, 1]} : vector<4x290xf32> to vector<4x256xf32>
    %18 = vector.broadcast %3 : vector<1x256xf32> to vector<4x256xf32>
    %19 = arith.mulf %17, %18 : vector<4x256xf32>
    %20 = vector.extract_strided_slice %5 {offsets = [0, 32], sizes = [4, 256], strides = [1, 1]} : vector<4x290xf32> to vector<4x256xf32>
    %21 = vector.broadcast %2 : vector<1x256xf32> to vector<4x256xf32>
    %22 = arith.mulf %20, %21 : vector<4x256xf32>
    %23 = vector.extract_strided_slice %5 {offsets = [0, 33], sizes = [4, 256], strides = [1, 1]} : vector<4x290xf32> to vector<4x256xf32>
    %24 = vector.extract_strided_slice %5 {offsets = [0, 34], sizes = [4, 256], strides = [1, 1]} : vector<4x290xf32> to vector<4x256xf32>
    %25 = vector.broadcast %3 : vector<1x256xf32> to vector<4x256xf32>
    %26 = arith.mulf %24, %25 : vector<4x256xf32>
    %27 = tpu.concatenate %8, %9, %12, %15, %16, %19, %22, %23, %26 in 0 : vector<4x256xf32>, vector<4x256xf32>, vector<4x256xf32>, vector<4x256xf32>, vector<4x256xf32>, vector<4x256xf32>, vector<4x256xf32>, vector<4x256xf32>, vector<4x256xf32> -> vector<36x256xf32>
    %c0_6 = arith.constant 0 : index
    %c0_7 = arith.constant 0 : index
    %28 = vector.load %arg2[%c0_6, %c0_7] : memref<32x36xf32, #tpu.memory_space<vmem>>, vector<32x36xf32>
    %cst_8 = arith.constant dense<0.000000e+00> : vector<32x256xf32>
    %29 = tpu.matmul %28, %27, %cst_8 {dimension_numbers = #tpu.dot_dimension_numbers<[1], [0], [0], [1], [0, 0, 1, 1], [], []>} : vector<32x36xf32>, vector<36x256xf32>, vector<32x256xf32> -> vector<32x256xf32>
    %c0_9 = arith.constant 0 : index
    %c0_10 = arith.constant 0 : index
    %30 = vector.load %arg3[%c0_9, %c0_10] : memref<32x1xf32, #tpu.memory_space<vmem>>, vector<32x1xf32>
    %31 = vector.broadcast %30 : vector<32x1xf32> to vector<32x256xf32>
    %32 = arith.addf %29, %31 : vector<32x256xf32>
    %cst_11 = arith.constant 0.000000e+00 : f32
    %33 = vector.broadcast %cst_11 : f32 to vector<32x256xf32>
    %34 = arith.maximumf %32, %33 : vector<32x256xf32>
    %cst_12 = arith.constant 0.000000e+00 : f32
    %35 = vector.broadcast %cst_12 : f32 to vector<32x17xf32>
    %36 = tpu.concatenate %35, %34, %35 in 1 : vector<32x17xf32>, vector<32x256xf32>, vector<32x17xf32> -> vector<32x290xf32>
    %c0_13 = arith.constant 0 : index
    %c0_14 = arith.constant 0 : index
    %37 = vector.load %arg4[%c0_13, %c0_14] : memref<4x288xf32, #tpu.memory_space<vmem>>, vector<4x288xf32>
    %cst_15 = arith.constant 0.000000e+00 : f32
    %38 = vector.broadcast %cst_15 : f32 to vector<4x256xf32>
    %39 = vector.extract_strided_slice %36 {offsets = [0, 0], sizes = [32, 256], strides = [1, 1]} : vector<32x290xf32> to vector<32x256xf32>
    %40 = vector.broadcast %2 : vector<1x256xf32> to vector<32x256xf32>
    %41 = arith.mulf %39, %40 : vector<32x256xf32>
    %42 = vector.extract_strided_slice %36 {offsets = [0, 1], sizes = [32, 256], strides = [1, 1]} : vector<32x290xf32> to vector<32x256xf32>
    %43 = vector.extract_strided_slice %36 {offsets = [0, 2], sizes = [32, 256], strides = [1, 1]} : vector<32x290xf32> to vector<32x256xf32>
    %44 = vector.broadcast %3 : vector<1x256xf32> to vector<32x256xf32>
    %45 = arith.mulf %43, %44 : vector<32x256xf32>
    %46 = tpu.concatenate %41, %42, %45 in 0 : vector<32x256xf32>, vector<32x256xf32>, vector<32x256xf32> -> vector<96x256xf32>
    %47 = vector.extract_strided_slice %37 {offsets = [0, 0], sizes = [4, 96], strides = [1, 1]} : vector<4x288xf32> to vector<4x96xf32>
    %cst_16 = arith.constant dense<0.000000e+00> : vector<4x256xf32>
    %48 = tpu.matmul %47, %46, %cst_16 {dimension_numbers = #tpu.dot_dimension_numbers<[1], [0], [0], [1], [0, 0, 1, 1], [], []>} : vector<4x96xf32>, vector<96x256xf32>, vector<4x256xf32> -> vector<4x256xf32>
    %49 = arith.addf %38, %48 : vector<4x256xf32>
    %50 = vector.extract_strided_slice %36 {offsets = [0, 16], sizes = [32, 256], strides = [1, 1]} : vector<32x290xf32> to vector<32x256xf32>
    %51 = vector.broadcast %2 : vector<1x256xf32> to vector<32x256xf32>
    %52 = arith.mulf %50, %51 : vector<32x256xf32>
    %53 = vector.extract_strided_slice %36 {offsets = [0, 17], sizes = [32, 256], strides = [1, 1]} : vector<32x290xf32> to vector<32x256xf32>
    %54 = vector.extract_strided_slice %36 {offsets = [0, 18], sizes = [32, 256], strides = [1, 1]} : vector<32x290xf32> to vector<32x256xf32>
    %55 = vector.broadcast %3 : vector<1x256xf32> to vector<32x256xf32>
    %56 = arith.mulf %54, %55 : vector<32x256xf32>
    %57 = tpu.concatenate %52, %53, %56 in 0 : vector<32x256xf32>, vector<32x256xf32>, vector<32x256xf32> -> vector<96x256xf32>
    %58 = vector.extract_strided_slice %37 {offsets = [0, 96], sizes = [4, 96], strides = [1, 1]} : vector<4x288xf32> to vector<4x96xf32>
    %cst_17 = arith.constant dense<0.000000e+00> : vector<4x256xf32>
    %59 = tpu.matmul %58, %57, %cst_17 {dimension_numbers = #tpu.dot_dimension_numbers<[1], [0], [0], [1], [0, 0, 1, 1], [], []>} : vector<4x96xf32>, vector<96x256xf32>, vector<4x256xf32> -> vector<4x256xf32>
    %60 = arith.addf %49, %59 : vector<4x256xf32>
    %61 = vector.extract_strided_slice %36 {offsets = [0, 32], sizes = [32, 256], strides = [1, 1]} : vector<32x290xf32> to vector<32x256xf32>
    %62 = vector.broadcast %2 : vector<1x256xf32> to vector<32x256xf32>
    %63 = arith.mulf %61, %62 : vector<32x256xf32>
    %64 = vector.extract_strided_slice %36 {offsets = [0, 33], sizes = [32, 256], strides = [1, 1]} : vector<32x290xf32> to vector<32x256xf32>
    %65 = vector.extract_strided_slice %36 {offsets = [0, 34], sizes = [32, 256], strides = [1, 1]} : vector<32x290xf32> to vector<32x256xf32>
    %66 = vector.broadcast %3 : vector<1x256xf32> to vector<32x256xf32>
    %67 = arith.mulf %65, %66 : vector<32x256xf32>
    %68 = tpu.concatenate %63, %64, %67 in 0 : vector<32x256xf32>, vector<32x256xf32>, vector<32x256xf32> -> vector<96x256xf32>
    %69 = vector.extract_strided_slice %37 {offsets = [0, 192], sizes = [4, 96], strides = [1, 1]} : vector<4x288xf32> to vector<4x96xf32>
    %cst_18 = arith.constant dense<0.000000e+00> : vector<4x256xf32>
    %70 = tpu.matmul %69, %68, %cst_18 {dimension_numbers = #tpu.dot_dimension_numbers<[1], [0], [0], [1], [0, 0, 1, 1], [], []>} : vector<4x96xf32>, vector<96x256xf32>, vector<4x256xf32> -> vector<4x256xf32>
    %71 = arith.addf %60, %70 : vector<4x256xf32>
    %c0_19 = arith.constant 0 : index
    %c0_20 = arith.constant 0 : index
    %72 = vector.load %arg5[%c0_19, %c0_20] : memref<4x1xf32, #tpu.memory_space<vmem>>, vector<4x1xf32>
    %73 = vector.broadcast %72 : vector<4x1xf32> to vector<4x256xf32>
    %74 = arith.addf %71, %73 : vector<4x256xf32>
    %c0_21 = arith.constant 0 : index
    %c0_22 = arith.constant 0 : index
    %c0_23 = arith.constant 0 : index
    %75 = vector.load %arg8[%c0_21, %c0_22, %c0_23] : memref<1x4x256xf32, #tpu.memory_space<vmem>>, vector<1x4x256xf32>
    %76 = vector.shape_cast %75 : vector<1x4x256xf32> to vector<4x256xf32>
    %77 = vector.shape_cast %74 : vector<4x256xf32> to vector<1x4x256xf32>
    tpu.vector_store %arg8[%c0_21, %c0_22, %c0_23], %77 {strides = array<i32>} : memref<1x4x256xf32, #tpu.memory_space<vmem>>, vector<1x4x256xf32>,
    return
  }
  func.func @transform_0(%arg0: i32) -> (i32, i32, i32) {
    %c0_i32 = arith.constant 0 : i32
    %c0_i32_0 = arith.constant 0 : i32
    %c0_i32_1 = arith.constant 0 : i32
    return %arg0, %c0_i32, %c0_i32_0 : i32, i32, i32
  }
  func.func @transform_1(%arg0: i32) -> (i32, i32) {
    %c0_i32 = arith.constant 0 : i32
    %c0_i32_0 = arith.constant 0 : i32
    %c0_i32_1 = arith.constant 0 : i32
    return %c0_i32, %c0_i32_0 : i32, i32
  }
  func.func @transform_2(%arg0: i32) -> (i32, i32) {
    %c0_i32 = arith.constant 0 : i32
    %c0_i32_0 = arith.constant 0 : i32
    %c0_i32_1 = arith.constant 0 : i32
    return %c0_i32, %c0_i32_0 : i32, i32
  }
  func.func @transform_3(%arg0: i32) -> (i32, i32) {
    %c0_i32 = arith.constant 0 : i32
    %c0_i32_0 = arith.constant 0 : i32
    %c0_i32_1 = arith.constant 0 : i32
    return %c0_i32, %c0_i32_0 : i32, i32
  }
  func.func @transform_4(%arg0: i32) -> (i32, i32) {
    %c0_i32 = arith.constant 0 : i32
    %c0_i32_0 = arith.constant 0 : i32
    %c0_i32_1 = arith.constant 0 : i32
    return %c0_i32, %c0_i32_0 : i32, i32
  }
  func.func @transform_5(%arg0: i32) -> (i32, i32) {
    %c0_i32 = arith.constant 0 : i32
    %c0_i32_0 = arith.constant 0 : i32
    %c0_i32_1 = arith.constant 0 : i32
    return %c0_i32, %c0_i32_0 : i32, i32
  }
  func.func @transform_6(%arg0: i32) -> (i32, i32) {
    %c0_i32 = arith.constant 0 : i32
    %c0_i32_0 = arith.constant 0 : i32
    %c0_i32_1 = arith.constant 0 : i32
    return %c0_i32, %c0_i32_0 : i32, i32
  }
  func.func @transform_7(%arg0: i32) -> (i32, i32, i32) {
    %c0_i32 = arith.constant 0 : i32
    %c0_i32_0 = arith.constant 0 : i32
    %c0_i32_1 = arith.constant 0 : i32
    return %arg0, %c0_i32, %c0_i32_0 : i32, i32, i32
  }
}

</mosaic_0001>

<llo_original>
// kernel: test_single_stage_denoise_only_forward.1
$region0: #{test_single_stage_denoise_only_forward.1}
  #allocation0 [shape = 'u32[]', space=smem, size = 0x4, offset = 0x4, fixed_abs, tag = 'smem constant byte address 0x4 - core index']
  #allocation1 [shape = 'u32[144,128]{1,0:T(1,128)}', space=vmem, size = 0x12000, scoped, tag = 'internal scratch']
  %s0 = inlined_call_operand.vmem [shape: f32[2,4,256], index: 0, kind: input, shape index: {}]
  %s1 = inlined_call_operand.vmem [shape: f32[32,36], index: 1, kind: input, shape index: {}]
  %s2 = inlined_call_operand.vmem [shape: f32[32,1], index: 2, kind: input, shape index: {}]
  %s3 = inlined_call_operand.vmem [shape: f32[4,288], index: 3, kind: input, shape index: {}]
  %s4 = inlined_call_operand.vmem [shape: f32[4,1], index: 4, kind: input, shape index: {}]
  %s5 = inlined_call_operand.vmem [shape: f32[1,256], index: 5, kind: input, shape index: {}]
  %s6 = inlined_call_operand.vmem [shape: f32[1,256], index: 6, kind: input, shape index: {}]
  %s7 = inlined_call_operand.vmem [shape: f32[2,4,256], index: 7, kind: output, shape index: {}]
  %s8 = sld [smem:[#allocation0]]
  $region61: #{test_single_stage_denoise_only_forward.1} parent=0
    _
  %s10 = ssub.s32 1, %s8
  %s11 = scalar_select 0, %s10, %s8
  loop: start=0, step=1, limit=4
  $region2: #{test_single_stage_denoise_only_forward.1} parent=0 // loop_pre_header
    _
  $region3: #{test_single_stage_denoise_only_forward.1} parent=0 // loop_header
    %s13 = sphi 0, %s17
    %p14 = scmp.ge.s32.totalorder %s13, 4
    %s23 = sphi 0, %s25
    %s26 = sphi 0, %s23
    %s27 = sphi 0, %s26
    %s43 = sphi 0, %s27
    %s47 = sphi 0, %s47
    %s49 = sphi 0, %s47
    %s50 = sphi 0, %s49
    %s64 = sphi 0, %s50
    %s68 = sphi 0, %s68
    %s70 = sphi 0, %s68
    %s71 = sphi 0, %s70
    %s85 = sphi 0, %s71
    %s89 = sphi 0, %s89
    %s91 = sphi 0, %s89
    %s92 = sphi 0, %s91
    %s106 = sphi 0, %s92
    %s110 = sphi 0, %s110
    %s112 = sphi 0, %s110
    %s113 = sphi 0, %s112
    %s127 = sphi 0, %s113
    %s131 = sphi 0, %s131
    %s133 = sphi 0, %s131
    %s134 = sphi 0, %s133
    %s148 = sphi 0, %s134
    %s152 = sphi 0, %s152
    %s154 = sphi 0, %s152
    %s155 = sphi 0, %s154
    %s169 = sphi 0, %s155
    %s175 = sphi 0, %s177
    %s178 = sphi 0, %s175
    %s179 = sphi 0, %s178
    %s195 = sphi 0, %s179
  $region4: #{test_single_stage_denoise_only_forward.1} parent=0 // loop_header_branch
    %16 = sbr.rel (%p14) target = $region8
  $region5: #{test_single_stage_denoise_only_forward.1} parent=0 // loop_body
    %s18 = ssub.s32 %s13, 1
    %s19 = ssub.s32 %s13, 2
    %s20 = sadd.s32 %s13, 1
    %s21 = ssub.s32 %s13, %s20
    %p22 = scmp.eq.s32.totalorder %s21, 0
    %s24 = sadd.s32 %s23, 1
    %s25 = scalar_select %p22, %s23, %s24
    %p28 = pneg %p22
    %p29 = scmp.eq.s32.totalorder %s13, 1
    %p30 = por %p28, %p29
    %p31 = scmp.ne.s32.totalorder %s23, %s26
    %p32 = scmp.eq.s32.totalorder %s13, 0
    %p33 = por %p31, %p32
    %p34 = scmp.ne.s32.totalorder %s23, %s26
    %p35 = scmp.eq.s32.totalorder %s18, 1
    %p36 = por %p34, %p35
    %p37 = scmp.ne.s32.totalorder %s26, %s27
    %p38 = scmp.eq.s32.totalorder %s18, 0
    %p39 = por %p37, %p38
    %p40 = scmp.ne.s32.totalorder %s26, %s27
    %p41 = scmp.eq.s32.totalorder %s19, 1
    %p42 = por %p40, %p41
    %p44 = scmp.ne.s32.totalorder %s27, %s43
    %p45 = scmp.eq.s32.totalorder %s19, 0
    %p46 = por %p44, %p45
    %s48 = sadd.s32 %s47, 1
    %p51 = scmp.eq.s32.totalorder %s13, 1
    %p52 = scmp.ne.s32.totalorder %s47, %s49
    %p53 = scmp.eq.s32.totalorder %s13, 0
    %p54 = por %p52, %p53
    %p55 = scmp.ne.s32.totalorder %s47, %s49
    %p56 = scmp.eq.s32.totalorder %s18, 1
    %p57 = por %p55, %p56
    %p58 = scmp.ne.s32.totalorder %s49, %s50
    %p59 = scmp.eq.s32.totalorder %s18, 0
    %p60 = por %p58, %p59
    %p61 = scmp.ne.s32.totalorder %s49, %s50
    %p62 = scmp.eq.s32.totalorder %s19, 1
    %p63 = por %p61, %p62
    %p65 = scmp.ne.s32.totalorder %s50, %s64
    %p66 = scmp.eq.s32.totalorder %s19, 0
    %p67 = por %p65, %p66
    %s69 = sadd.s32 %s68, 1
    %p72 = scmp.eq.s32.totalorder %s13, 1
    %p73 = scmp.ne.s32.totalorder %s68, %s70
    %p74 = scmp.eq.s32.totalorder %s13, 0
    %p75 = por %p73, %p74
    %p76 = scmp.ne.s32.totalorder %s68, %s70
    %p77 = scmp.eq.s32.totalorder %s18, 1
    %p78 = por %p76, %p77
    %p79 = scmp.ne.s32.totalorder %s70, %s71
    %p80 = scmp.eq.s32.totalorder %s18, 0
    %p81 = por %p79, %p80
    %p82 = scmp.ne.s32.totalorder %s70, %s71
    %p83 = scmp.eq.s32.totalorder %s19, 1
    %p84 = por %p82, %p83
    %p86 = scmp.ne.s32.totalorder %s71, %s85
    %p87 = scmp.eq.s32.totalorder %s19, 0
    %p88 = por %p86, %p87
    %s90 = sadd.s32 %s89, 1
    %p93 = scmp.eq.s32.totalorder %s13, 1
    %p94 = scmp.ne.s32.totalorder %s89, %s91
    %p95 = scmp.eq.s32.totalorder %s13, 0
    %p96 = por %p94, %p95
    %p97 = scmp.ne.s32.totalorder %s89, %s91
    %p98 = scmp.eq.s32.totalorder %s18, 1
    %p99 = por %p97, %p98
    %p100 = scmp.ne.s32.totalorder %s91, %s92
    %p101 = scmp.eq.s32.totalorder %s18, 0
    %p102 = por %p100, %p101
    %p103 = scmp.ne.s32.totalorder %s91, %s92
    %p104 = scmp.eq.s32.totalorder %s19, 1
    %p105 = por %p103, %p104
    %p107 = scmp.ne.s32.totalorder %s92, %s106
    %p108 = scmp.eq.s32.totalorder %s19, 0
    %p109 = por %p107, %p108
    %s111 = sadd.s32 %s110, 1
    %p114 = scmp.eq.s32.totalorder %s13, 1
    %p115 = scmp.ne.s32.totalorder %s110, %s112
    %p116 = scmp.eq.s32.totalorder %s13, 0
    %p117 = por %p115, %p116
    %p118 = scmp.ne.s32.totalorder %s110, %s112
    %p119 = scmp.eq.s32.totalorder %s18, 1
    %p120 = por %p118, %p119
    %p121 = scmp.ne.s32.totalorder %s112, %s113
    %p122 = scmp.eq.s32.totalorder %s18, 0
    %p123 = por %p121, %p122
    %p124 = scmp.ne.s32.totalorder %s112, %s113
    %p125 = scmp.eq.s32.totalorder %s19, 1
    %p126 = por %p124, %p125
    %p128 = scmp.ne.s32.totalorder %s113, %s127
    %p129 = scmp.eq.s32.totalorder %s19, 0
    %p130 = por %p128, %p129
    %s132 = sadd.s32 %s131, 1
    %p135 = scmp.eq.s32.totalorder %s13, 1
    %p136 = scmp.ne.s32.totalorder %s131, %s133
    %p137 = scmp.eq.s32.totalorder %s13, 0
    %p138 = por %p136, %p137
    %p139 = scmp.ne.s32.totalorder %s131, %s133
    %p140 = scmp.eq.s32.totalorder %s18, 1
    %p141 = por %p139, %p140
    %p142 = scmp.ne.s32.totalorder %s133, %s134
    %p143 = scmp.eq.s32.totalorder %s18, 0
    %p144 = por %p142, %p143
    %p145 = scmp.ne.s32.totalorder %s133, %s134
    %p146 = scmp.eq.s32.totalorder %s19, 1
    %p147 = por %p145, %p146
    %p149 = scmp.ne.s32.totalorder %s134, %s148
    %p150 = scmp.eq.s32.totalorder %s19, 0
    %p151 = por %p149, %p150
    %s153 = sadd.s32 %s152, 1
    %p156 = scmp.eq.s32.totalorder %s13, 1
    %p157 = scmp.ne.s32.totalorder %s152, %s154
    %p158 = scmp.eq.s32.totalorder %s13, 0
    %p159 = por %p157, %p158
    %p160 = scmp.ne.s32.totalorder %s152, %s154
    %p161 = scmp.eq.s32.totalorder %s18, 1
    %p162 = por %p160, %p161
    %p163 = scmp.ne.s32.totalorder %s154, %s155
    %p164 = scmp.eq.s32.totalorder %s18, 0
    %p165 = por %p163, %p164
    %p166 = scmp.ne.s32.totalorder %s154, %s155
    %p167 = scmp.eq.s32.totalorder %s19, 1
    %p168 = por %p166, %p167
    %p170 = scmp.ne.s32.totalorder %s155, %s169
    %p171 = scmp.eq.s32.totalorder %s19, 0
    %p172 = por %p170, %p171
    %s173 = ssub.s32 %s13, %s20
    %p174 = scmp.eq.s32.totalorder %s173, 0
    %s176 = sadd.s32 %s175, 1
    %s177 = scalar_select %p174, %s175, %s176
    %p180 = pneg %p174
    %p181 = scmp.eq.s32.totalorder %s13, 1
    %p182 = por %p180, %p181
    %p183 = scmp.ne.s32.totalorder %s175, %s178
    %p184 = scmp.eq.s32.totalorder %s13, 0
    %p185 = por %p183, %p184
    %p186 = scmp.ne.s32.totalorder %s175, %s178
    %p187 = scmp.eq.s32.totalorder %s18, 1
    %p188 = por %p186, %p187
    %p189 = scmp.ne.s32.totalorder %s178, %s179
    %p190 = scmp.eq.s32.totalorder %s18, 0
    %p191 = por %p189, %p190
    %p192 = scmp.ne.s32.totalorder %s178, %s179
    %p193 = scmp.eq.s32.totalorder %s19, 1
    %p194 = por %p192, %p193
    %p196 = scmp.ne.s32.totalorder %s179, %s195
    %p197 = scmp.eq.s32.totalorder %s19, 0
    %p198 = por %p196, %p197
    %p199 = scmp.le.s32.totalorder 1, %s13
    %p200 = scmp.lt.s32.totalorder %s13, 3
    %p201 = pnand %p199, %p200
    %p202 = pneg %p201
    // Predicated region
    $region9: #{test_single_stage_denoise_only_forward.1} parent=5 // pred_check
      _
    $region10: #{test_single_stage_denoise_only_forward.1} parent=5 // pred_check_branch
      %204 = sbr.rel (%p201) target = $region12
    $region11: #{test_single_stage_denoise_only_forward.1} parent=5 // pred_region
      %s205 = ssub.s32 %s13, 1
      // Predicated region
      $region13: #{test_single_stage_denoise_only_forward.1} parent=11 // pred_check
        %p206 = pneg %p60
      $region14: #{test_single_stage_denoise_only_forward.1} parent=11 // pred_check_branch
        %208 = sbr.rel (%p206) target = $region16
      $region15: #{test_single_stage_denoise_only_forward.1} parent=11 // pred_region
        _
      $region16: #{test_single_stage_denoise_only_forward.1} parent=11 // pred_fallthru
        _
      // Predicated region
      $region17: #{test_single_stage_denoise_only_forward.1} parent=11 // pred_check
        %p209 = pneg %p81
      $region18: #{test_single_stage_denoise_only_forward.1} parent=11 // pred_check_branch
        %211 = sbr.rel (%p209) target = $region20
      $region19: #{test_single_stage_denoise_only_forward.1} parent=11 // pred_region
        _
      $region20: #{test_single_stage_denoise_only_forward.1} parent=11 // pred_fallthru
        _
      // Predicated region
      $region21: #{test_single_stage_denoise_only_forward.1} parent=11 // pred_check
        %p212 = pneg %p102
      $region22: #{test_single_stage_denoise_only_forward.1} parent=11 // pred_check_branch
        %214 = sbr.rel (%p212) target = $region24
      $region23: #{test_single_stage_denoise_only_forward.1} parent=11 // pred_region
        _
      $region24: #{test_single_stage_denoise_only_forward.1} parent=11 // pred_fallthru
        _
      // Predicated region
      $region25: #{test_single_stage_denoise_only_forward.1} parent=11 // pred_check
        %p215 = pneg %p123
      $region26: #{test_single_stage_denoise_only_forward.1} parent=11 // pred_check_branch
        %217 = sbr.rel (%p215) target = $region28
      $region27: #{test_single_stage_denoise_only_forward.1} parent=11 // pred_region
        _
      $region28: #{test_single_stage_denoise_only_forward.1} parent=11 // pred_fallthru
        _
      // Predicated region
      $region29: #{test_single_stage_denoise_only_forward.1} parent=11 // pred_check
        %p218 = pneg %p144
      $region30: #{test_single_stage_denoise_only_forward.1} parent=11 // pred_check_branch
        %220 = sbr.rel (%p218) target = $region32
      $region31: #{test_single_stage_denoise_only_forward.1} parent=11 // pred_region
        _
      $region32: #{test_single_stage_denoise_only_forward.1} parent=11 // pred_fallthru
        _
      // Predicated region
      $region33: #{test_single_stage_denoise_only_forward.1} parent=11 // pred_check
        %p221 = pneg %p165
      $region34: #{test_single_stage_denoise_only_forward.1} parent=11 // pred_check_branch
        %223 = sbr.rel (%p221) target = $region36
      $region35: #{test_single_stage_denoise_only_forward.1} parent=11 // pred_region
        _
      $region36: #{test_single_stage_denoise_only_forward.1} parent=11 // pred_fallthru
        _
    $region12: #{test_single_stage_denoise_only_forward.1} parent=5 // pred_fallthru
      _
    %p224 = scmp.lt.s32.totalorder %s13, 2
    // Predicated region
    $region37: #{test_single_stage_denoise_only_forward.1} parent=5 // pred_check
      %p225 = pneg %p224
    $region38: #{test_single_stage_denoise_only_forward.1} parent=5 // pred_check_branch
      %227 = sbr.rel (%p225) target = $region40
    $region39: #{test_single_stage_denoise_only_forward.1} parent=5 // pred_region
      // Predicated region
      $region41: #{test_single_stage_denoise_only_forward.1} parent=39 // pred_check
        %p228 = pneg %p33
      $region42: #{test_single_stage_denoise_only_forward.1} parent=39 // pred_check_branch
        %230 = sbr.rel (%p228) target = $region44
      $region43: #{test_single_stage_denoise_only_forward.1} parent=39 // pred_region
        %p231 = scmp.lt.s32.totalorder %s13, 1
        %s232 = scalar_select %p231, %s13, 1
        %s233 = smul.addr %s232, 2
        %s234 = smul.addr %s233, 4
        %s235 = scalar_lea.vmem %s0, %s234
      $region44: #{test_single_stage_denoise_only_forward.1} parent=39 // pred_fallthru
        _
    $region40: #{test_single_stage_denoise_only_forward.1} parent=5 // pred_fallthru
      _
    %p236 = scmp.le.s32.totalorder 1, %s13
    %p237 = scmp.lt.s32.totalorder %s13, 3
    %p238 = pnand %p236, %p237
    %p239 = pneg %p238
    // Predicated region
    $region45: #{test_single_stage_denoise_only_forward.1} parent=5 // pred_check
      _
    $region46: #{test_single_stage_denoise_only_forward.1} parent=5 // pred_check_branch
      %241 = sbr.rel (%p238) target = $region48
    $region47: #{test_single_stage_denoise_only_forward.1} parent=5 // pred_region
      %s242 = ssub.s32 %s13, 1
      %p243 = scmp.lt.s32.totalorder %s18, 1
      %s244 = scalar_select %p243, %s18, 1
      %s245 = smul.addr %s244, 2
      %s246 = smul.addr %s245, 4
      %s247 = scalar_lea.vmem %s0, %s246
      %p248 = pneg %p39
      %p249 = pneg %p36
      %p250 = pneg %p60
      %p251 = pneg %p57
      %p252 = pneg %p81
      %p253 = pneg %p78
      %p254 = pneg %p102
      %p255 = pneg %p99
      %p256 = pneg %p123
      %p257 = pneg %p120
      %p258 = pneg %p144
      %p259 = pneg %p141
      %p260 = pneg %p165
      %p261 = pneg %p162
      %p262 = pneg %p191
      %p263 = pneg %p188
      %p264 = scmp.lt.s32.totalorder %s18, 1
      %s265 = scalar_select %p264, %s18, 1
      %s266 = smul.addr %s265, 2
      %s267 = smul.addr %s266, 4
      %s268 = scalar_lea.vmem %s7, %s267
      %p269 = scmp.lt.s32.totalorder %s18, 1
      %s270 = scalar_select %p269, %s18, 1
      %s271 = smul.addr %s270, 2
      %s272 = smul.addr %s271, 4
      %s273 = scalar_lea.vmem %s0, %s272
      %p274 = scmp.lt.s32.totalorder %s18, 1
      %s275 = scalar_select %p274, %s18, 1
      %s276 = smul.addr %s275, 2
      %s277 = smul.addr %s276, 4
      %s278 = scalar_lea.vmem %s7, %s277
      %v279 = vld [vmem:[%s273] sm:$0xff]
      %v280 = vld [vmem:[%s5] sm:$0x3]
      %v281 = vld [vmem:[%s6] sm:$0x3]
      %v283 = vcombine.high %v279, %v279
      %284 = vrot.lane.b32.xlu0 %v279, 17
      %v285 = vpop.permute.xlu0 %284
      %286 = vrot.lane.b32.xlu0 %v283, 17
      %v287 = vpop.permute.xlu0 %286
      %vm288 = vcmask 138240
      %v289 = vsel %vm288, %v285, %v287
      %v293 = vsel %vm288, 0.0, %v285
      %v294 = vsel %vm288, %v287, 0.0
      %v296 = vlaneseq
      %v297 = vshrl.u32 %v296, 7
      %v298 = vsub.s32 0, %v297
      %v299 = vrot.slane %v280, %v298
      %v300 = vlaneseq
      %v301 = vshrl.u32 %v300, 7
      %v302 = vsub.s32 1, %v301
      %v303 = vrot.slane %v280, %v302
      %v306 = vmul.f32 %v293, %v299
      %v307 = vmul.f32 %v289, %v303
      %v309 = vlaneseq
      %v310 = vshrl.u32 %v309, 7
      %v311 = vsub.s32 0, %v310
      %v312 = vrot.slane %v281, %v311
      %v313 = vlaneseq
      %v314 = vshrl.u32 %v313, 7
      %v315 = vsub.s32 1, %v314
      %v316 = vrot.slane %v281, %v315
      %317 = vrot.lane.b32.xlu0 %v312, 2
      %v318 = vpop.permute.xlu0 %317
      %319 = vrot.lane.b32.xlu0 %v316, 2
      %v320 = vpop.permute.xlu0 %319
      %vm321 = vcmask 15360
      %v322 = vsel %vm321, %v318, %v320
      %v326 = vmul.f32 %v293, %v318
      %v327 = vmul.f32 %v289, %v322
      %v328 = vmul.f32 %v294, %v320
      %329 = vrot.lane.b32.xlu0 %v299, 16
      %v330 = vpop.permute.xlu0 %329
      %331 = vrot.lane.b32.xlu0 %v303, 16
      %v332 = vpop.permute.xlu0 %331
      %vm333 = vcmask 130048
      %v334 = vsel %vm333, %v330, %v332
      %v338 = vmul.f32 %v293, %v330
      %v339 = vmul.f32 %v289, %v334
      %v340 = vmul.f32 %v294, %v332
      %341 = vrot.lane.b32.xlu0 %v312, 18
      %v342 = vpop.permute.xlu0 %341
      %343 = vrot.lane.b32.xlu0 %v316, 18
      %v344 = vpop.permute.xlu0 %343
      %vm345 = vcmask 146432
      %v346 = vsel %vm345, %v342, %v344
      %v350 = vmul.f32 %v293, %v342
      %v351 = vmul.f32 %v289, %v346
      %v352 = vmul.f32 %v294, %v344
      %353 = vrot.lane.b32.xlu0 %v299, 32
      %v354 = vpop.permute.xlu0 %353
      %355 = vrot.lane.b32.xlu0 %v303, 32
      %v356 = vpop.permute.xlu0 %355
      %vm357 = vcmask 261120
      %v358 = vsel %vm357, %v354, %v356
      %v362 = vmul.f32 %v293, %v354
      %v363 = vmul.f32 %v289, %v358
      %v364 = vmul.f32 %v294, %v356
      %365 = vrot.lane.b32.xlu0 %v312, 34
      %v366 = vpop.permute.xlu0 %365
      %367 = vrot.lane.b32.xlu0 %v316, 34
      %v368 = vpop.permute.xlu0 %367
      %vm369 = vcmask 277504
      %v370 = vsel %vm369, %v366, %v368
      %v374 = vmul.f32 %v293, %v366
      %v375 = vmul.f32 %v289, %v370
      %v376 = vmul.f32 %v294, %v368
      %v379 = vrot.slane %v293, 4
      %v380 = vrot.slane %v289, 4
      %v381 = vrot.slane %v294, 4
      %382 = vrot.lane.b32.xlu0 %v379, 127
      %v383 = vpop.permute.xlu0 %382
      %384 = vrot.lane.b32.xlu0 %v380, 127
      %v385 = vpop.permute.xlu0 %384
      %386 = vrot.lane.b32.xlu0 %v381, 127
      %v387 = vpop.permute.xlu0 %386
      %vm388 = vcmask 1039360
      %v389 = vsel %vm388, %v383, %v385
      %v390 = vsel %vm388, %v385, %v387
      %396 = vrot.lane.b32.xlu0 %v326, 126
      %v397 = vpop.permute.xlu0 %396
      %398 = vrot.lane.b32.xlu0 %v327, 126
      %v399 = vpop.permute.xlu0 %398
      %400 = vrot.lane.b32.xlu0 %v328, 126
      %v401 = vpop.permute.xlu0 %400
      %vm402 = vcmask 1031168
      %v403 = vsel %vm402, %v397, %v399
      %v404 = vsel %vm402, %v399, %v401
      %v410 = vrot.slane %v338, 4
      %v411 = vrot.slane %v339, 4
      %v412 = vrot.slane %v340, 4
      %413 = vrot.lane.b32.xlu0 %v410, 112
      %v414 = vpop.permute.xlu0 %413
      %415 = vrot.lane.b32.xlu0 %v411, 112
      %v416 = vpop.permute.xlu0 %415
      %417 = vrot.lane.b32.xlu0 %v412, 112
      %v418 = vpop.permute.xlu0 %417
      %vm419 = vcmask 916480
      %v420 = vsel %vm419, %v414, %v416
      %v421 = vsel %vm419, %v416, %v418
      %424 = vrot.lane.b32.xlu0 %v293, 111
      %v425 = vpop.permute.xlu0 %424
      %426 = vrot.lane.b32.xlu0 %v289, 111
      %v427 = vpop.permute.xlu0 %426
      %428 = vrot.lane.b32.xlu0 %v294, 111
      %v429 = vpop.permute.xlu0 %428
      %vm430 = vcmask 908288
      %v431 = vsel %vm430, %v425, %v427
      %v432 = vsel %vm430, %v427, %v429
      %v438 = vrot.slane %v350, 4
      %v439 = vrot.slane %v351, 4
      %v440 = vrot.slane %v352, 4
      %441 = vrot.lane.b32.xlu0 %v438, 110
      %v442 = vpop.permute.xlu0 %441
      %443 = vrot.lane.b32.xlu0 %v439, 110
      %v444 = vpop.permute.xlu0 %443
      %445 = vrot.lane.b32.xlu0 %v440, 110
      %v446 = vpop.permute.xlu0 %445
      %vm447 = vcmask 900096
      %v448 = vsel %vm447, %v442, %v444
      %v449 = vsel %vm447, %v444, %v446
      %455 = vrot.lane.b32.xlu0 %v362, 96
      %v456 = vpop.permute.xlu0 %455
      %457 = vrot.lane.b32.xlu0 %v363, 96
      %v458 = vpop.permute.xlu0 %457
      %459 = vrot.lane.b32.xlu0 %v364, 96
      %v460 = vpop.permute.xlu0 %459
      %vm461 = vcmask 785408
      %v462 = vsel %vm461, %v456, %v458
      %v463 = vsel %vm461, %v458, %v460
      %466 = vrot.lane.b32.xlu0 %v379, 95
      %v467 = vpop.permute.xlu0 %466
      %468 = vrot.lane.b32.xlu0 %v380, 95
      %v469 = vpop.permute.xlu0 %468
      %470 = vrot.lane.b32.xlu0 %v381, 95
      %v471 = vpop.permute.xlu0 %470
      %vm472 = vcmask 777216
      %v473 = vsel %vm472, %v467, %v469
      %v474 = vsel %vm472, %v469, %v471
      %480 = vrot.lane.b32.xlu0 %v374, 94
      %v481 = vpop.permute.xlu0 %480
      %482 = vrot.lane.b32.xlu0 %v375, 94
      %v483 = vpop.permute.xlu0 %482
      %484 = vrot.lane.b32.xlu0 %v376, 94
      %v485 = vpop.permute.xlu0 %484
      %vm486 = vcmask 769024
      %v487 = vsel %vm486, %v481, %v483
      %v488 = vsel %vm486, %v483, %v485
      %vm489 = vcmask 1043456
      %v490 = vsel %vm489, %v306, %v389
      %v491 = vsel %vm489, %v307, %v390
      %v492 = vsel %vm489, %v403, %v420
      %v493 = vsel %vm489, %v404, %v421
      %v494 = vsel %vm489, %v431, %v448
      %v495 = vsel %vm489, %v432, %v449
      %v496 = vsel %vm489, %v462, %v473
      %v497 = vsel %vm489, %v463, %v474
      %v498 = vld [vmem:[%s1] sm:$0xff]
      %v499 = vld [vmem:[%s1 + $0x8] sm:$0xff]
      %v500 = vld [vmem:[%s1 + $0x10] sm:$0xff]
      %v501 = vld [vmem:[%s1 + $0x18] sm:$0xff]
      %v502 = vld [vmem:[%s2] sm:$0xff]
      %v503 = vld [vmem:[%s2 + $0x8] sm:$0xff]
      %v504 = vld [vmem:[%s2 + $0x10] sm:$0xff]
      %v505 = vld [vmem:[%s2 + $0x18] sm:$0xff]
      %507 = vset.pattern.permute.xlu0 0
      %508 = vperm.xlu0 %507, %v502
      %v509 = vpop.permute.xlu0 %508
      %512 = vset.pattern.permute.xlu0 0
      %513 = vperm.xlu0 %512, %v503
      %v514 = vpop.permute.xlu0 %513
      %517 = vset.pattern.permute.xlu0 0
      %518 = vperm.xlu0 %517, %v504
      %v519 = vpop.permute.xlu0 %518
      %522 = vset.pattern.permute.xlu0 0
      %523 = vperm.xlu0 %522, %v505
      %v524 = vpop.permute.xlu0 %523
      %vm526 = vcmask 293888
      %v528 = vsel %vm526, %v498, 0
      %v531 = vsel %vm526, %v499, 0
      %v534 = vsel %vm526, %v500, 0
      %v537 = vsel %vm526, %v501, 0
      %v539 = vsel %vm489, %v487, 0
      %v541 = vsel %vm489, %v488, 0
      %543 = vmatprep.subr.mxu0 %v491
      %544 = vmatpush1.msra.mxu0 %v490
      %545 = vmatprep.subr.mxu0 %v493
      %546 = vmatpush1.msra.mxu0 %v492
      %547 = vmatprep.subr.mxu0 %v495
      %548 = vmatpush1.msra.mxu0 %v494
      %549 = vmatprep.subr.mxu0 %v497
      %550 = vmatpush1.msra.mxu0 %v496
      %551 = vmatprep.subr.mxu0 %v541
      %552 = vmatpush1.msra.mxu0 %v539
      %553 = vmatprep.subr.mxu0 0.0
      %554 = vmatpush1.msra.mxu0 0.0
      %555 = vmatprep.subr.mxu0 0.0
      %556 = vmatpush1.msra.mxu0 0.0
      %557 = vmatprep.subr.mxu0 0.0
      %558 = vmatpush1.msra.mxu0 0.0
      %559 = vmatprep.subr.mxu0 0.0
      %560 = vmatpush1.msra.mxu0 0.0
      %561 = vmatprep.subr.mxu0 0.0
      %562 = vmatpush1.msra.mxu0 0.0
      %563 = vmatprep.subr.mxu0 0.0
      %564 = vmatpush1.msra.mxu0 0.0
      %565 = vmatprep.subr.mxu0 0.0
      %566 = vmatpush1.msra.mxu0 0.0
      %567 = vmatprep.subr.mxu0 0.0
      %568 = vmatpush1.msra.mxu0 0.0
      %569 = vmatprep.subr.mxu0 0.0
      %570 = vmatpush1.msra.mxu0 0.0
      %571 = vmatprep.subr.mxu0 0.0
      %572 = vmatpush1.msra.mxu0 0.0
      %573 = vmatprep.subr.mxu0 0.0
      %574 = vmatpush1.msra.mxu0 0.0
      %575 = vmatprep.subr.mxu0 0.0
      %576 = vmatpush1.msra.mxu0 0.0
      %577 = vmatprep.subr.mxu0 0.0
      %578 = vmatpush1.msra.mxu0 0.0
      %579 = vmatprep.subr.mxu0 0.0
      %580 = vmatpush1.msra.mxu0 0.0
      %581 = vmatprep.subr.mxu0 0.0
      %582 = vmatpush1.msra.mxu0 0.0
      %583 = vmatprep.subr.mxu0 0.0
      %584 = vmatpush1.msra.mxu0 0.0
      %585 = vmatprep.subr.mxu0 0.0
      %586 = vmatpush1.msra.mxu0 0.0
      %587 = vmatprep.subr.mxu0 0.0
      %588 = vmatpush1.msra.mxu0 0.0
      %589 = vmatprep.subr.mxu0 0.0
      %590 = vmatpush1.msra.mxu0 0.0
      %591 = vmatprep.subr.mxu0 0.0
      %592 = vmatpush1.msra.mxu0 0.0
      %593 = vmatprep.subr.mxu0 0.0
      %594 = vmatpush1.msra.mxu0 0.0
      %595 = vmatprep.subr.mxu0 0.0
      %596 = vmatpush1.msra.mxu0 0.0
      %597 = vmatprep.subr.mxu0 0.0
      %598 = vmatpush1.msra.mxu0 0.0
      %599 = vmatprep.subr.mxu0 0.0
      %600 = vmatpush1.msra.mxu0 0.0
      %601 = vmatprep.subr.mxu0 0.0
      %602 = vmatpush1.msra.mxu0 0.0
      %603 = vmatprep.subr.mxu0 0.0
      %604 = vmatpush1.msra.mxu0 0.0
      %605 = vmatprep.subr.mxu0 0.0
      %606 = vmatpush1.msra.mxu0 0.0
      %607 = vmatprep.mubr.f32.mxu0 0.0
      %608 = vmatmul.mubr.f32.gmra.mrb[0].mxu0 %v528
      %v609 = vpop.f32.mrb[0].mxu0
      %v610 = vadd.f32 %v509, %v609
      %v611 = vpop.f32.mrb[0].mxu0
      %v612 = vadd.f32 %v509, %v611
      %613 = vmatprep.mubr.f32.mxu0 0.0
      %614 = vmatmul.mubr.f32.gmra.mrb[0].mxu0 %v531
      %v615 = vpop.f32.mrb[0].mxu0
      %v616 = vadd.f32 %v514, %v615
      %v617 = vpop.f32.mrb[0].mxu0
      %v618 = vadd.f32 %v514, %v617
      %619 = vmatprep.mubr.f32.mxu0 0.0
      %620 = vmatmul.mubr.f32.gmra.mrb[0].mxu0 %v534
      %v621 = vpop.f32.mrb[0].mxu0
      %v622 = vadd.f32 %v519, %v621
      %v623 = vpop.f32.mrb[0].mxu0
      %v624 = vadd.f32 %v519, %v623
      %625 = vmatprep.mubr.f32.mxu0 0.0
      %626 = vmatmul.mubr.f32.gmra.mrb[0].mxu0 %v537
      %v627 = vpop.f32.mrb[0].mxu0
      %v628 = vadd.f32 %v524, %v627
      %v629 = vpop.f32.mrb[0].mxu0
      %v630 = vadd.f32 %v524, %v629
      %631 = vdwg.mxu0
      %v632 = vmax.f32 %v610, 0.0
      %v633 = vmax.f32 %v612, 0.0
      %v634 = vmax.f32 %v616, 0.0
      %v635 = vmax.f32 %v618, 0.0
      %v636 = vmax.f32 %v622, 0.0
      %v637 = vmax.f32 %v624, 0.0
      %v638 = vmax.f32 %v628, 0.0
      %v639 = vmax.f32 %v630, 0.0
      %648 = vrot.lane.b32.xlu0 %v632, 17
      %v649 = vpop.permute.xlu0 %648
      %650 = vrot.lane.b32.xlu0 %v633, 17
      %v651 = vpop.permute.xlu0 %650
      %652 = vrot.lane.b32.xlu0 %v634, 17
      %v653 = vpop.permute.xlu0 %652
      %654 = vrot.lane.b32.xlu0 %v635, 17
      %v655 = vpop.permute.xlu0 %654
      %656 = vrot.lane.b32.xlu0 %v636, 17
      %v657 = vpop.permute.xlu0 %656
      %658 = vrot.lane.b32.xlu0 %v637, 17
      %v659 = vpop.permute.xlu0 %658
      %660 = vrot.lane.b32.xlu0 %v638, 17
      %v661 = vpop.permute.xlu0 %660
      %662 = vrot.lane.b32.xlu0 %v639, 17
      %v663 = vpop.permute.xlu0 %662
      %v664 = vsel %vm288, %v649, %v651
      %v665 = vsel %vm288, %v653, %v655
      %v666 = vsel %vm288, %v657, %v659
      %v667 = vsel %vm288, %v661, %v663
      %v680 = vsel %vm288, 0.0, %v649
      %v681 = vsel %vm288, 0.0, %v653
      %v682 = vsel %vm288, 0.0, %v657
      %v683 = vsel %vm288, 0.0, %v661
      %v684 = vsel %vm288, %v651, 0.0
      %v685 = vsel %vm288, %v655, 0.0
      %v686 = vsel %vm288, %v659, 0.0
      %v687 = vsel %vm288, %v663, 0.0
      %v688 = vld [vmem:[%s3] sm:$0xff]
      %v689 = vld [vmem:[%s3 + $0x8] sm:$0xf]
      %v690 = vmul.f32 %v680, %v299
      %v691 = vmul.f32 %v664, %v303
      %v692 = vmul.f32 %v681, %v299
      %v693 = vmul.f32 %v665, %v303
      %v694 = vmul.f32 %v682, %v299
      %v695 = vmul.f32 %v666, %v303
      %v696 = vmul.f32 %v683, %v299
      %v697 = vmul.f32 %v667, %v303
      %v698 = vmul.f32 %v680, %v318
      %v699 = vmul.f32 %v664, %v322
      %v700 = vmul.f32 %v684, %v320
      %v701 = vmul.f32 %v681, %v318
      %v702 = vmul.f32 %v665, %v322
      %v703 = vmul.f32 %v685, %v320
      %v704 = vmul.f32 %v682, %v318
      %v705 = vmul.f32 %v666, %v322
      %v706 = vmul.f32 %v686, %v320
      %v707 = vmul.f32 %v683, %v318
      %v708 = vmul.f32 %v667, %v322
      %v709 = vmul.f32 %v687, %v320
      %718 = vrot.lane.b32.xlu0 %v680, 127
      %v719 = vpop.permute.xlu0 %718
      %720 = vrot.lane.b32.xlu0 %v664, 127
      %v721 = vpop.permute.xlu0 %720
      %722 = vrot.lane.b32.xlu0 %v684, 127
      %v723 = vpop.permute.xlu0 %722
      %724 = vrot.lane.b32.xlu0 %v681, 127
      %v725 = vpop.permute.xlu0 %724
      %726 = vrot.lane.b32.xlu0 %v665, 127
      %v727 = vpop.permute.xlu0 %726
      %728 = vrot.lane.b32.xlu0 %v685, 127
      %v729 = vpop.permute.xlu0 %728
      %730 = vrot.lane.b32.xlu0 %v682, 127
      %v731 = vpop.permute.xlu0 %730
      %732 = vrot.lane.b32.xlu0 %v666, 127
      %v733 = vpop.permute.xlu0 %732
      %734 = vrot.lane.b32.xlu0 %v686, 127
      %v735 = vpop.permute.xlu0 %734
      %736 = vrot.lane.b32.xlu0 %v683, 127
      %v737 = vpop.permute.xlu0 %736
      %738 = vrot.lane.b32.xlu0 %v667, 127
      %v739 = vpop.permute.xlu0 %738
      %740 = vrot.lane.b32.xlu0 %v687, 127
      %v741 = vpop.permute.xlu0 %740
      %v742 = vsel %vm388, %v719, %v721
      %v743 = vsel %vm388, %v721, %v723
      %v744 = vsel %vm388, %v725, %v727
      %v745 = vsel %vm388, %v727, %v729
      %v746 = vsel %vm388, %v731, %v733
      %v747 = vsel %vm388, %v733, %v735
      %v748 = vsel %vm388, %v737, %v739
      %v749 = vsel %vm388, %v739, %v741
      %770 = vrot.lane.b32.xlu0 %v698, 126
      %v771 = vpop.permute.xlu0 %770
      %772 = vrot.lane.b32.xlu0 %v699, 126
      %v773 = vpop.permute.xlu0 %772
      %774 = vrot.lane.b32.xlu0 %v700, 126
      %v775 = vpop.permute.xlu0 %774
      %776 = vrot.lane.b32.xlu0 %v701, 126
      %v777 = vpop.permute.xlu0 %776
      %778 = vrot.lane.b32.xlu0 %v702, 126
      %v779 = vpop.permute.xlu0 %778
      %780 = vrot.lane.b32.xlu0 %v703, 126
      %v781 = vpop.permute.xlu0 %780
      %782 = vrot.lane.b32.xlu0 %v704, 126
      %v783 = vpop.permute.xlu0 %782
      %784 = vrot.lane.b32.xlu0 %v705, 126
      %v785 = vpop.permute.xlu0 %784
      %786 = vrot.lane.b32.xlu0 %v706, 126
      %v787 = vpop.permute.xlu0 %786
      %788 = vrot.lane.b32.xlu0 %v707, 126
      %v789 = vpop.permute.xlu0 %788
      %790 = vrot.lane.b32.xlu0 %v708, 126
      %v791 = vpop.permute.xlu0 %790
      %792 = vrot.lane.b32.xlu0 %v709, 126
      %v793 = vpop.permute.xlu0 %792
      %v794 = vsel %vm402, %v771, %v773
      %v795 = vsel %vm402, %v773, %v775
      %v796 = vsel %vm402, %v777, %v779
      %v797 = vsel %vm402, %v779, %v781
      %v798 = vsel %vm402, %v783, %v785
      %v799 = vsel %vm402, %v785, %v787
      %v800 = vsel %vm402, %v789, %v791
      %v801 = vsel %vm402, %v791, %v793
      %v810 = vmul.f32 %v680, %v330
      %v811 = vmul.f32 %v664, %v334
      %v812 = vmul.f32 %v684, %v332
      %v813 = vmul.f32 %v681, %v330
      %v814 = vmul.f32 %v665, %v334
      %v815 = vmul.f32 %v685, %v332
      %v816 = vmul.f32 %v682, %v330
      %v817 = vmul.f32 %v666, %v334
      %v818 = vmul.f32 %v686, %v332
      %v819 = vmul.f32 %v683, %v330
      %v820 = vmul.f32 %v667, %v334
      %v821 = vmul.f32 %v687, %v332
      %v822 = vmul.f32 %v680, %v342
      %v823 = vmul.f32 %v664, %v346
      %v824 = vmul.f32 %v684, %v344
      %v825 = vmul.f32 %v681, %v342
      %v826 = vmul.f32 %v665, %v346
      %v827 = vmul.f32 %v685, %v344
      %v828 = vmul.f32 %v682, %v342
      %v829 = vmul.f32 %v666, %v346
      %v830 = vmul.f32 %v686, %v344
      %v831 = vmul.f32 %v683, %v342
      %v832 = vmul.f32 %v667, %v346
      %v833 = vmul.f32 %v687, %v344
      %846 = vrot.lane.b32.xlu0 %v822, 126
      %v847 = vpop.permute.xlu0 %846
      %848 = vrot.lane.b32.xlu0 %v823, 126
      %v849 = vpop.permute.xlu0 %848
      %850 = vrot.lane.b32.xlu0 %v824, 126
      %v851 = vpop.permute.xlu0 %850
      %852 = vrot.lane.b32.xlu0 %v825, 126
      %v853 = vpop.permute.xlu0 %852
      %854 = vrot.lane.b32.xlu0 %v826, 126
      %v855 = vpop.permute.xlu0 %854
      %856 = vrot.lane.b32.xlu0 %v827, 126
      %v857 = vpop.permute.xlu0 %856
      %858 = vrot.lane.b32.xlu0 %v828, 126
      %v859 = vpop.permute.xlu0 %858
      %860 = vrot.lane.b32.xlu0 %v829, 126
      %v861 = vpop.permute.xlu0 %860
      %862 = vrot.lane.b32.xlu0 %v830, 126
      %v863 = vpop.permute.xlu0 %862
      %864 = vrot.lane.b32.xlu0 %v831, 126
      %v865 = vpop.permute.xlu0 %864
      %866 = vrot.lane.b32.xlu0 %v832, 126
      %v867 = vpop.permute.xlu0 %866
      %868 = vrot.lane.b32.xlu0 %v833, 126
      %v869 = vpop.permute.xlu0 %868
      %v870 = vsel %vm402, %v847, %v849
      %v871 = vsel %vm402, %v849, %v851
      %v872 = vsel %vm402, %v853, %v855
      %v873 = vsel %vm402, %v855, %v857
      %v874 = vsel %vm402, %v859, %v861
      %v875 = vsel %vm402, %v861, %v863
      %v876 = vsel %vm402, %v865, %v867
      %v877 = vsel %vm402, %v867, %v869
      %v879 = vcombine.high %v688, %v688
      %880 = vrot.lane.b32.xlu0 %v688, 32
      %v881 = vpop.permute.xlu0 %880
      %882 = vrot.lane.b32.xlu0 %v879, 32
      %v883 = vpop.permute.xlu0 %882
      %v884 = vsel %vm357, %v881, %v883
      %897 = vrot.lane.b32.xlu0 %v810, 112
      %v898 = vpop.permute.xlu0 %897
      %899 = vrot.lane.b32.xlu0 %v811, 112
      %v900 = vpop.permute.xlu0 %899
      %901 = vrot.lane.b32.xlu0 %v812, 112
      %v902 = vpop.permute.xlu0 %901
      %903 = vrot.lane.b32.xlu0 %v813, 112
      %v904 = vpop.permute.xlu0 %903
      %905 = vrot.lane.b32.xlu0 %v814, 112
      %v906 = vpop.permute.xlu0 %905
      %907 = vrot.lane.b32.xlu0 %v815, 112
      %v908 = vpop.permute.xlu0 %907
      %909 = vrot.lane.b32.xlu0 %v816, 112
      %v910 = vpop.permute.xlu0 %909
      %911 = vrot.lane.b32.xlu0 %v817, 112
      %v912 = vpop.permute.xlu0 %911
      %913 = vrot.lane.b32.xlu0 %v818, 112
      %v914 = vpop.permute.xlu0 %913
      %915 = vrot.lane.b32.xlu0 %v819, 112
      %v916 = vpop.permute.xlu0 %915
      %917 = vrot.lane.b32.xlu0 %v820, 112
      %v918 = vpop.permute.xlu0 %917
      %919 = vrot.lane.b32.xlu0 %v821, 112
      %v920 = vpop.permute.xlu0 %919
      %921 = vrot.lane.b32.xlu0 %v742, 112
      %v922 = vpop.permute.xlu0 %921
      %923 = vrot.lane.b32.xlu0 %v743, 112
      %v924 = vpop.permute.xlu0 %923
      %925 = vrot.lane.b32.xlu0 %v723, 112
      %v926 = vpop.permute.xlu0 %925
      %927 = vrot.lane.b32.xlu0 %v744, 112
      %v928 = vpop.permute.xlu0 %927
      %929 = vrot.lane.b32.xlu0 %v745, 112
      %v930 = vpop.permute.xlu0 %929
      %931 = vrot.lane.b32.xlu0 %v729, 112
      %v932 = vpop.permute.xlu0 %931
      %933 = vrot.lane.b32.xlu0 %v746, 112
      %v934 = vpop.permute.xlu0 %933
      %935 = vrot.lane.b32.xlu0 %v747, 112
      %v936 = vpop.permute.xlu0 %935
      %937 = vrot.lane.b32.xlu0 %v735, 112
      %v938 = vpop.permute.xlu0 %937
      %939 = vrot.lane.b32.xlu0 %v748, 112
      %v940 = vpop.permute.xlu0 %939
      %941 = vrot.lane.b32.xlu0 %v749, 112
      %v942 = vpop.permute.xlu0 %941
      %943 = vrot.lane.b32.xlu0 %v741, 112
      %v944 = vpop.permute.xlu0 %943
      %945 = vrot.lane.b32.xlu0 %v870, 112
      %v946 = vpop.permute.xlu0 %945
      %947 = vrot.lane.b32.xlu0 %v871, 112
      %v948 = vpop.permute.xlu0 %947
      %949 = vrot.lane.b32.xlu0 %v851, 112
      %v950 = vpop.permute.xlu0 %949
      %951 = vrot.lane.b32.xlu0 %v872, 112
      %v952 = vpop.permute.xlu0 %951
      %953 = vrot.lane.b32.xlu0 %v873, 112
      %v954 = vpop.permute.xlu0 %953
      %955 = vrot.lane.b32.xlu0 %v857, 112
      %v956 = vpop.permute.xlu0 %955
      %957 = vrot.lane.b32.xlu0 %v874, 112
      %v958 = vpop.permute.xlu0 %957
      %959 = vrot.lane.b32.xlu0 %v875, 112
      %v960 = vpop.permute.xlu0 %959
      %961 = vrot.lane.b32.xlu0 %v863, 112
      %v962 = vpop.permute.xlu0 %961
      %963 = vrot.lane.b32.xlu0 %v876, 112
      %v964 = vpop.permute.xlu0 %963
      %965 = vrot.lane.b32.xlu0 %v877, 112
      %v966 = vpop.permute.xlu0 %965
      %967 = vrot.lane.b32.xlu0 %v869, 112
      %v968 = vpop.permute.xlu0 %967
      %v969 = vsel %vm419, %v898, %v900
      %v970 = vsel %vm419, %v900, %v902
      %v971 = vsel %vm419, %v904, %v906
      %v972 = vsel %vm419, %v906, %v908
      %v973 = vsel %vm419, %v910, %v912
      %v974 = vsel %vm419, %v912, %v914
      %v975 = vsel %vm419, %v916, %v918
      %v976 = vsel %vm419, %v918, %v920
      %v977 = vsel %vm419, %v922, %v924
      %v978 = vsel %vm419, %v924, %v926
      %v979 = vsel %vm419, %v928, %v930
      %v980 = vsel %vm419, %v930, %v932
      %v981 = vsel %vm419, %v934, %v936
      %v982 = vsel %vm419, %v936, %v938
      %v983 = vsel %vm419, %v940, %v942
      %v984 = vsel %vm419, %v942, %v944
      %v985 = vsel %vm419, %v946, %v948
      %v986 = vsel %vm419, %v948, %v950
      %v987 = vsel %vm419, %v952, %v954
      %v988 = vsel %vm419, %v954, %v956
      %v989 = vsel %vm419, %v958, %v960
      %v990 = vsel %vm419, %v960, %v962
      %v991 = vsel %vm419, %v964, %v966
      %v992 = vsel %vm419, %v966, %v968
      %v1017 = vsel %vm461, %v884, 0
      %1019 = vmatprep.subr.mxu0 %v970
      %1020 = vmatpush1.msra.mxu0 %v969
      %1021 = vmatprep.subr.mxu0 %v972
      %1022 = vmatpush1.msra.mxu0 %v971
      %1023 = vmatprep.subr.mxu0 %v974
      %1024 = vmatpush1.msra.mxu0 %v973
      %1025 = vmatprep.subr.mxu0 %v976
      %1026 = vmatpush1.msra.mxu0 %v975
      %1027 = vmatprep.subr.mxu0 %v978
      %1028 = vmatpush1.msra.mxu0 %v977
      %1029 = vmatprep.subr.mxu0 %v980
      %1030 = vmatpush1.msra.mxu0 %v979
      %1031 = vmatprep.subr.mxu0 %v982
      %1032 = vmatpush1.msra.mxu0 %v981
      %1033 = vmatprep.subr.mxu0 %v984
      %1034 = vmatpush1.msra.mxu0 %v983
      %1035 = vmatprep.subr.mxu0 %v986
      %1036 = vmatpush1.msra.mxu0 %v985
      %1037 = vmatprep.subr.mxu0 %v988
      %1038 = vmatpush1.msra.mxu0 %v987
      %1039 = vmatprep.subr.mxu0 %v990
      %1040 = vmatpush1.msra.mxu0 %v989
      %1041 = vmatprep.subr.mxu0 %v992
      %1042 = vmatpush1.msra.mxu0 %v991
      %1043 = vmatprep.subr.mxu0 0.0
      %1044 = vmatpush1.msra.mxu0 0.0
      %1045 = vmatprep.subr.mxu0 0.0
      %1046 = vmatpush1.msra.mxu0 0.0
      %1047 = vmatprep.subr.mxu0 0.0
      %1048 = vmatpush1.msra.mxu0 0.0
      %1049 = vmatprep.subr.mxu0 0.0
      %1050 = vmatpush1.msra.mxu0 0.0
      %1051 = vmatprep.subr.mxu0 0.0
      %1052 = vmatpush1.msra.mxu0 0.0
      %1053 = vmatprep.subr.mxu0 0.0
      %1054 = vmatpush1.msra.mxu0 0.0
      %1055 = vmatprep.subr.mxu0 0.0
      %1056 = vmatpush1.msra.mxu0 0.0
      %1057 = vmatprep.subr.mxu0 0.0
      %1058 = vmatpush1.msra.mxu0 0.0
      %1059 = vmatprep.subr.mxu0 0.0
      %1060 = vmatpush1.msra.mxu0 0.0
      %1061 = vmatprep.subr.mxu0 0.0
      %1062 = vmatpush1.msra.mxu0 0.0
      %1063 = vmatprep.subr.mxu0 0.0
      %1064 = vmatpush1.msra.mxu0 0.0
      %1065 = vmatprep.subr.mxu0 0.0
      %1066 = vmatpush1.msra.mxu0 0.0
      %1067 = vmatprep.subr.mxu0 0.0
      %1068 = vmatpush1.msra.mxu0 0.0
      %1069 = vmatprep.subr.mxu0 0.0
      %1070 = vmatpush1.msra.mxu0 0.0
      %1071 = vmatprep.subr.mxu0 0.0
      %1072 = vmatpush1.msra.mxu0 0.0
      %1073 = vmatprep.subr.mxu0 0.0
      %1074 = vmatpush1.msra.mxu0 0.0
      %1075 = vmatprep.subr.mxu0 0.0
      %1076 = vmatpush1.msra.mxu0 0.0
      %1077 = vmatprep.subr.mxu0 0.0
      %1078 = vmatpush1.msra.mxu0 0.0
      %1079 = vmatprep.subr.mxu0 0.0
      %1080 = vmatpush1.msra.mxu0 0.0
      %1081 = vmatprep.subr.mxu0 0.0
      %1082 = vmatpush1.msra.mxu0 0.0
      %1083 = vmatprep.mubr.f32.mxu0 0.0
      %1084 = vmatmul.mubr.f32.gmra.mrb[0].mxu0 %v1017
      %v1085 = vpop.f32.mrb[0].mxu0
      %v1086 = vadd.f32 0.0, %v1085
      %v1087 = vpop.f32.mrb[0].mxu0
      %v1088 = vadd.f32 0.0, %v1087
      %1089 = vdwg.mxu0
      %v1090 = vsel %vm461, %v688, 0
      %1092 = vmatprep.subr.mxu0 %v691
      %1093 = vmatpush1.msra.mxu0 %v690
      %1094 = vmatprep.subr.mxu0 %v693
      %1095 = vmatpush1.msra.mxu0 %v692
      %1096 = vmatprep.subr.mxu0 %v695
      %1097 = vmatpush1.msra.mxu0 %v694
      %1098 = vmatprep.subr.mxu0 %v697
      %1099 = vmatpush1.msra.mxu0 %v696
      %1100 = vmatprep.subr.mxu0 %v743
      %1101 = vmatpush1.msra.mxu0 %v742
      %1102 = vmatprep.subr.mxu0 %v745
      %1103 = vmatpush1.msra.mxu0 %v744
      %1104 = vmatprep.subr.mxu0 %v747
      %1105 = vmatpush1.msra.mxu0 %v746
      %1106 = vmatprep.subr.mxu0 %v749
      %1107 = vmatpush1.msra.mxu0 %v748
      %1108 = vmatprep.subr.mxu0 %v795
      %1109 = vmatpush1.msra.mxu0 %v794
      %1110 = vmatprep.subr.mxu0 %v797
      %1111 = vmatpush1.msra.mxu0 %v796
      %1112 = vmatprep.subr.mxu0 %v799
      %1113 = vmatpush1.msra.mxu0 %v798
      %1114 = vmatprep.subr.mxu0 %v801
      %1115 = vmatpush1.msra.mxu0 %v800
      %1116 = vmatprep.subr.mxu0 0.0
      %1117 = vmatpush1.msra.mxu0 0.0
      %1118 = vmatprep.subr.mxu0 0.0
      %1119 = vmatpush1.msra.mxu0 0.0
      %1120 = vmatprep.subr.mxu0 0.0
      %1121 = vmatpush1.msra.mxu0 0.0
      %1122 = vmatprep.subr.mxu0 0.0
      %1123 = vmatpush1.msra.mxu0 0.0
      %1124 = vmatprep.subr.mxu0 0.0
      %1125 = vmatpush1.msra.mxu0 0.0
      %1126 = vmatprep.subr.mxu0 0.0
      %1127 = vmatpush1.msra.mxu0 0.0
      %1128 = vmatprep.subr.mxu0 0.0
      %1129 = vmatpush1.msra.mxu0 0.0
      %1130 = vmatprep.subr.mxu0 0.0
      %1131 = vmatpush1.msra.mxu0 0.0
      %1132 = vmatprep.subr.mxu0 0.0
      %1133 = vmatpush1.msra.mxu0 0.0
      %1134 = vmatprep.subr.mxu0 0.0
      %1135 = vmatpush1.msra.mxu0 0.0
      %1136 = vmatprep.subr.mxu0 0.0
      %1137 = vmatpush1.msra.mxu0 0.0
      %1138 = vmatprep.subr.mxu0 0.0
      %1139 = vmatpush1.msra.mxu0 0.0
      %1140 = vmatprep.subr.mxu0 0.0
      %1141 = vmatpush1.msra.mxu0 0.0
      %1142 = vmatprep.subr.mxu0 0.0
      %1143 = vmatpush1.msra.mxu0 0.0
      %1144 = vmatprep.subr.mxu0 0.0
      %1145 = vmatpush1.msra.mxu0 0.0
      %1146 = vmatprep.subr.mxu0 0.0
      %1147 = vmatpush1.msra.mxu0 0.0
      %1148 = vmatprep.subr.mxu0 0.0
      %1149 = vmatpush1.msra.mxu0 0.0
      %1150 = vmatprep.subr.mxu0 0.0
      %1151 = vmatpush1.msra.mxu0 0.0
      %1152 = vmatprep.subr.mxu0 0.0
      %1153 = vmatpush1.msra.mxu0 0.0
      %1154 = vmatprep.subr.mxu0 0.0
      %1155 = vmatpush1.msra.mxu0 0.0
      %1156 = vmatprep.mubr.f32.mxu0 0.0
      %1157 = vmatmul.mubr.f32.gmra.mrb[0].mxu0 %v1090
      %v1158 = vpop.f32.mrb[0].mxu0
      %v1159 = vadd.f32 %v1086, %v1158
      %v1160 = vpop.f32.mrb[0].mxu0
      %v1161 = vadd.f32 %v1088, %v1160
      %1162 = vdwg.mxu0
      %v1163 = vmul.f32 %v680, %v354
      %v1164 = vmul.f32 %v664, %v358
      %v1165 = vmul.f32 %v684, %v356
      %v1166 = vmul.f32 %v681, %v354
      %v1167 = vmul.f32 %v665, %v358
      %v1168 = vmul.f32 %v685, %v356
      %v1169 = vmul.f32 %v682, %v354
      %v1170 = vmul.f32 %v666, %v358
      %v1171 = vmul.f32 %v686, %v356
      %v1172 = vmul.f32 %v683, %v354
      %v1173 = vmul.f32 %v667, %v358
      %v1174 = vmul.f32 %v687, %v356
      %v1175 = vmul.f32 %v680, %v366
      %v1176 = vmul.f32 %v664, %v370
      %v1177 = vmul.f32 %v684, %v368
      %v1178 = vmul.f32 %v681, %v366
      %v1179 = vmul.f32 %v665, %v370
      %v1180 = vmul.f32 %v685, %v368
      %v1181 = vmul.f32 %v682, %v366
      %v1182 = vmul.f32 %v666, %v370
      %v1183 = vmul.f32 %v686, %v368
      %v1184 = vmul.f32 %v683, %v366
      %v1185 = vmul.f32 %v667, %v370
      %v1186 = vmul.f32 %v687, %v368
      %1199 = vrot.lane.b32.xlu0 %v1175, 126
      %v1200 = vpop.permute.xlu0 %1199
      %1201 = vrot.lane.b32.xlu0 %v1176, 126
      %v1202 = vpop.permute.xlu0 %1201
      %1203 = vrot.lane.b32.xlu0 %v1177, 126
      %v1204 = vpop.permute.xlu0 %1203
      %1205 = vrot.lane.b32.xlu0 %v1178, 126
      %v1206 = vpop.permute.xlu0 %1205
      %1207 = vrot.lane.b32.xlu0 %v1179, 126
      %v1208 = vpop.permute.xlu0 %1207
      %1209 = vrot.lane.b32.xlu0 %v1180, 126
      %v1210 = vpop.permute.xlu0 %1209
      %1211 = vrot.lane.b32.xlu0 %v1181, 126
      %v1212 = vpop.permute.xlu0 %1211
      %1213 = vrot.lane.b32.xlu0 %v1182, 126
      %v1214 = vpop.permute.xlu0 %1213
      %1215 = vrot.lane.b32.xlu0 %v1183, 126
      %v1216 = vpop.permute.xlu0 %1215
      %1217 = vrot.lane.b32.xlu0 %v1184, 126
      %v1218 = vpop.permute.xlu0 %1217
      %1219 = vrot.lane.b32.xlu0 %v1185, 126
      %v1220 = vpop.permute.xlu0 %1219
      %1221 = vrot.lane.b32.xlu0 %v1186, 126
      %v1222 = vpop.permute.xlu0 %1221
      %v1223 = vsel %vm402, %v1200, %v1202
      %v1224 = vsel %vm402, %v1202, %v1204
      %v1225 = vsel %vm402, %v1206, %v1208
      %v1226 = vsel %vm402, %v1208, %v1210
      %v1227 = vsel %vm402, %v1212, %v1214
      %v1228 = vsel %vm402, %v1214, %v1216
      %v1229 = vsel %vm402, %v1218, %v1220
      %v1230 = vsel %vm402, %v1220, %v1222
      %1232 = vrot.lane.b32.xlu0 %v879, 64
      %v1233 = vpop.permute.xlu0 %1232
      %1234 = vrot.lane.b32.xlu0 %v689, 64
      %v1235 = vpop.permute.xlu0 %1234
      %vm1236 = vcmask 523264
      %v1237 = vsel %vm1236, %v1233, %v1235
      %1250 = vrot.lane.b32.xlu0 %v1163, 96
      %v1251 = vpop.permute.xlu0 %1250
      %1252 = vrot.lane.b32.xlu0 %v1164, 96
      %v1253 = vpop.permute.xlu0 %1252
      %1254 = vrot.lane.b32.xlu0 %v1165, 96
      %v1255 = vpop.permute.xlu0 %1254
      %1256 = vrot.lane.b32.xlu0 %v1166, 96
      %v1257 = vpop.permute.xlu0 %1256
      %1258 = vrot.lane.b32.xlu0 %v1167, 96
      %v1259 = vpop.permute.xlu0 %1258
      %1260 = vrot.lane.b32.xlu0 %v1168, 96
      %v1261 = vpop.permute.xlu0 %1260
      %1262 = vrot.lane.b32.xlu0 %v1169, 96
      %v1263 = vpop.permute.xlu0 %1262
      %1264 = vrot.lane.b32.xlu0 %v1170, 96
      %v1265 = vpop.permute.xlu0 %1264
      %1266 = vrot.lane.b32.xlu0 %v1171, 96
      %v1267 = vpop.permute.xlu0 %1266
      %1268 = vrot.lane.b32.xlu0 %v1172, 96
      %v1269 = vpop.permute.xlu0 %1268
      %1270 = vrot.lane.b32.xlu0 %v1173, 96
      %v1271 = vpop.permute.xlu0 %1270
      %1272 = vrot.lane.b32.xlu0 %v1174, 96
      %v1273 = vpop.permute.xlu0 %1272
      %1274 = vrot.lane.b32.xlu0 %v742, 96
      %v1275 = vpop.permute.xlu0 %1274
      %1276 = vrot.lane.b32.xlu0 %v743, 96
      %v1277 = vpop.permute.xlu0 %1276
      %1278 = vrot.lane.b32.xlu0 %v723, 96
      %v1279 = vpop.permute.xlu0 %1278
      %1280 = vrot.lane.b32.xlu0 %v744, 96
      %v1281 = vpop.permute.xlu0 %1280
      %1282 = vrot.lane.b32.xlu0 %v745, 96
      %v1283 = vpop.permute.xlu0 %1282
      %1284 = vrot.lane.b32.xlu0 %v729, 96
      %v1285 = vpop.permute.xlu0 %1284
      %1286 = vrot.lane.b32.xlu0 %v746, 96
      %v1287 = vpop.permute.xlu0 %1286
      %1288 = vrot.lane.b32.xlu0 %v747, 96
      %v1289 = vpop.permute.xlu0 %1288
      %1290 = vrot.lane.b32.xlu0 %v735, 96
      %v1291 = vpop.permute.xlu0 %1290
      %1292 = vrot.lane.b32.xlu0 %v748, 96
      %v1293 = vpop.permute.xlu0 %1292
      %1294 = vrot.lane.b32.xlu0 %v749, 96
      %v1295 = vpop.permute.xlu0 %1294
      %1296 = vrot.lane.b32.xlu0 %v741, 96
      %v1297 = vpop.permute.xlu0 %1296
      %1298 = vrot.lane.b32.xlu0 %v1223, 96
      %v1299 = vpop.permute.xlu0 %1298
      %1300 = vrot.lane.b32.xlu0 %v1224, 96
      %v1301 = vpop.permute.xlu0 %1300
      %1302 = vrot.lane.b32.xlu0 %v1204, 96
      %v1303 = vpop.permute.xlu0 %1302
      %1304 = vrot.lane.b32.xlu0 %v1225, 96
      %v1305 = vpop.permute.xlu0 %1304
      %1306 = vrot.lane.b32.xlu0 %v1226, 96
      %v1307 = vpop.permute.xlu0 %1306
      %1308 = vrot.lane.b32.xlu0 %v1210, 96
      %v1309 = vpop.permute.xlu0 %1308
      %1310 = vrot.lane.b32.xlu0 %v1227, 96
      %v1311 = vpop.permute.xlu0 %1310
      %1312 = vrot.lane.b32.xlu0 %v1228, 96
      %v1313 = vpop.permute.xlu0 %1312
      %1314 = vrot.lane.b32.xlu0 %v1216, 96
      %v1315 = vpop.permute.xlu0 %1314
      %1316 = vrot.lane.b32.xlu0 %v1229, 96
      %v1317 = vpop.permute.xlu0 %1316
      %1318 = vrot.lane.b32.xlu0 %v1230, 96
      %v1319 = vpop.permute.xlu0 %1318
      %1320 = vrot.lane.b32.xlu0 %v1222, 96
      %v1321 = vpop.permute.xlu0 %1320
      %v1322 = vsel %vm461, %v1251, %v1253
      %v1323 = vsel %vm461, %v1253, %v1255
      %v1324 = vsel %vm461, %v1257, %v1259
      %v1325 = vsel %vm461, %v1259, %v1261
      %v1326 = vsel %vm461, %v1263, %v1265
      %v1327 = vsel %vm461, %v1265, %v1267
      %v1328 = vsel %vm461, %v1269, %v1271
      %v1329 = vsel %vm461, %v1271, %v1273
      %v1330 = vsel %vm461, %v1275, %v1277
      %v1331 = vsel %vm461, %v1277, %v1279
      %v1332 = vsel %vm461, %v1281, %v1283
      %v1333 = vsel %vm461, %v1283, %v1285
      %v1334 = vsel %vm461, %v1287, %v1289
      %v1335 = vsel %vm461, %v1289, %v1291
      %v1336 = vsel %vm461, %v1293, %v1295
      %v1337 = vsel %vm461, %v1295, %v1297
      %v1338 = vsel %vm461, %v1299, %v1301
      %v1339 = vsel %vm461, %v1301, %v1303
      %v1340 = vsel %vm461, %v1305, %v1307
      %v1341 = vsel %vm461, %v1307, %v1309
      %v1342 = vsel %vm461, %v1311, %v1313
      %v1343 = vsel %vm461, %v1313, %v1315
      %v1344 = vsel %vm461, %v1317, %v1319
      %v1345 = vsel %vm461, %v1319, %v1321
      %v1370 = vsel %vm461, %v1237, 0
      %1372 = vmatprep.subr.mxu0 %v1323
      %1373 = vmatpush1.msra.mxu0 %v1322
      %1374 = vmatprep.subr.mxu0 %v1325
      %1375 = vmatpush1.msra.mxu0 %v1324
      %1376 = vmatprep.subr.mxu0 %v1327
      %1377 = vmatpush1.msra.mxu0 %v1326
      %1378 = vmatprep.subr.mxu0 %v1329
      %1379 = vmatpush1.msra.mxu0 %v1328
      %1380 = vmatprep.subr.mxu0 %v1331
      %1381 = vmatpush1.msra.mxu0 %v1330
      %1382 = vmatprep.subr.mxu0 %v1333
      %1383 = vmatpush1.msra.mxu0 %v1332
      %1384 = vmatprep.subr.mxu0 %v1335
      %1385 = vmatpush1.msra.mxu0 %v1334
      %1386 = vmatprep.subr.mxu0 %v1337
      %1387 = vmatpush1.msra.mxu0 %v1336
      %1388 = vmatprep.subr.mxu0 %v1339
      %1389 = vmatpush1.msra.mxu0 %v1338
      %1390 = vmatprep.subr.mxu0 %v1341
      %1391 = vmatpush1.msra.mxu0 %v1340
      %1392 = vmatprep.subr.mxu0 %v1343
      %1393 = vmatpush1.msra.mxu0 %v1342
      %1394 = vmatprep.subr.mxu0 %v1345
      %1395 = vmatpush1.msra.mxu0 %v1344
      %1396 = vmatprep.subr.mxu0 0.0
      %1397 = vmatpush1.msra.mxu0 0.0
      %1398 = vmatprep.subr.mxu0 0.0
      %1399 = vmatpush1.msra.mxu0 0.0
      %1400 = vmatprep.subr.mxu0 0.0
      %1401 = vmatpush1.msra.mxu0 0.0
      %1402 = vmatprep.subr.mxu0 0.0
      %1403 = vmatpush1.msra.mxu0 0.0
      %1404 = vmatprep.subr.mxu0 0.0
      %1405 = vmatpush1.msra.mxu0 0.0
      %1406 = vmatprep.subr.mxu0 0.0
      %1407 = vmatpush1.msra.mxu0 0.0
      %1408 = vmatprep.subr.mxu0 0.0
      %1409 = vmatpush1.msra.mxu0 0.0
      %1410 = vmatprep.subr.mxu0 0.0
      %1411 = vmatpush1.msra.mxu0 0.0
      %1412 = vmatprep.subr.mxu0 0.0
      %1413 = vmatpush1.msra.mxu0 0.0
      %1414 = vmatprep.subr.mxu0 0.0
      %1415 = vmatpush1.msra.mxu0 0.0
      %1416 = vmatprep.subr.mxu0 0.0
      %1417 = vmatpush1.msra.mxu0 0.0
      %1418 = vmatprep.subr.mxu0 0.0
      %1419 = vmatpush1.msra.mxu0 0.0
      %1420 = vmatprep.subr.mxu0 0.0
      %1421 = vmatpush1.msra.mxu0 0.0
      %1422 = vmatprep.subr.mxu0 0.0
      %1423 = vmatpush1.msra.mxu0 0.0
      %1424 = vmatprep.subr.mxu0 0.0
      %1425 = vmatpush1.msra.mxu0 0.0
      %1426 = vmatprep.subr.mxu0 0.0
      %1427 = vmatpush1.msra.mxu0 0.0
      %1428 = vmatprep.subr.mxu0 0.0
      %1429 = vmatpush1.msra.mxu0 0.0
      %1430 = vmatprep.subr.mxu0 0.0
      %1431 = vmatpush1.msra.mxu0 0.0
      %1432 = vmatprep.subr.mxu0 0.0
      %1433 = vmatpush1.msra.mxu0 0.0
      %1434 = vmatprep.subr.mxu0 0.0
      %1435 = vmatpush1.msra.mxu0 0.0
      %1436 = vmatprep.mubr.f32.mxu0 0.0
      %1437 = vmatmul.mubr.f32.gmra.mrb[0].mxu0 %v1370
      %v1438 = vpop.f32.mrb[0].mxu0
      %v1439 = vadd.f32 0.0, %v1438
      %v1440 = vpop.f32.mrb[0].mxu0
      %v1441 = vadd.f32 0.0, %v1440
      %1442 = vdwg.mxu0
      %v1443 = vadd.f32 %v1159, %v1439
      %v1444 = vadd.f32 %v1161, %v1441
      %v1445 = vld [vmem:[%s4] sm:$0xf]
      %1447 = vset.pattern.permute.xlu0 0
      %1448 = vperm.xlu0 %1447, %v1445
      %v1449 = vpop.permute.xlu0 %1448
      %v1451 = vadd.f32 %v1443, %v1449
      %v1452 = vadd.f32 %v1444, %v1449
      %v1455 = vcombine.low %v1451, %v1452
      %1457 = vst [vmem:[%s278] sm:$0xff] %v1455
      %p1458 = scmp.lt.s32.totalorder %s18, 1
      %s1459 = scalar_select %p1458, %s18, 1
      %s1460 = smul.addr %s1459, 2
      %s1461 = smul.addr %s1460, 4
      %s1462 = scalar_lea.vmem %s7, %s1461
      // Predicated region
      $region49: #{test_single_stage_denoise_only_forward.1} parent=47 // pred_check
        %p1463 = pneg %p188
      $region50: #{test_single_stage_denoise_only_forward.1} parent=47 // pred_check_branch
        %1465 = sbr.rel (%p1463) target = $region52
      $region51: #{test_single_stage_denoise_only_forward.1} parent=47 // pred_region
        _
      $region52: #{test_single_stage_denoise_only_forward.1} parent=47 // pred_fallthru
        _
    $region48: #{test_single_stage_denoise_only_forward.1} parent=5 // pred_fallthru
      _
    %p1466 = scmp.le.s32.totalorder 2, %s13
    // Predicated region
    $region53: #{test_single_stage_denoise_only_forward.1} parent=5 // pred_check
      %p1467 = pneg %p1466
    $region54: #{test_single_stage_denoise_only_forward.1} parent=5 // pred_check_branch
      %1469 = sbr.rel (%p1467) target = $region56
    $region55: #{test_single_stage_denoise_only_forward.1} parent=5 // pred_region
      %s1470 = ssub.s32 %s13, 2
      // Predicated region
      $region57: #{test_single_stage_denoise_only_forward.1} parent=55 // pred_check
        %p1471 = pneg %p194
      $region58: #{test_single_stage_denoise_only_forward.1} parent=55 // pred_check_branch
        %1473 = sbr.rel (%p1471) target = $region60
      $region59: #{test_single_stage_denoise_only_forward.1} parent=55 // pred_region
        %p1474 = scmp.lt.s32.totalorder %s19, 1
        %s1475 = scalar_select %p1474, %s19, 1
        %s1476 = smul.addr %s1475, 2
        %s1477 = smul.addr %s1476, 4
        %s1478 = scalar_lea.vmem %s7, %s1477
      $region60: #{test_single_stage_denoise_only_forward.1} parent=55 // pred_fallthru
        _
    $region56: #{test_single_stage_denoise_only_forward.1} parent=5 // pred_fallthru
      _
  $region6: #{test_single_stage_denoise_only_forward.1} parent=0 // loop_footer
    %s17 = sadd.s32 1, %s13
  $region7: #{test_single_stage_denoise_only_forward.1} parent=0 // loop_footer_branch
    %12 = sbr.rel target = $region3
  $region8: #{test_single_stage_denoise_only_forward.1} parent=0 // loop_exit
    _

</llo_original>
